<compile_context>
chip_gen: v7x
topology: tpu7x:2x2x1
jax: 0.10.0
libtpu: 0.0.40
codegen_flags: <defaults>
</compile_context>

<pallas_src>
import functools

import jax
import jax.numpy as jnp
from jax.experimental import pallas as pl
from jax.experimental.pallas import tpu as pltpu


def _round_up(x, m):
    return ((x + m - 1) // m) * m


# ---------------------------------------------------------------------------
# Fused kernel: grid=(L,), one grid step per stacked layer.
# ---------------------------------------------------------------------------
def stacked_lstm_kernel(x_ref, h0_ref, c0_ref, w_ref, b_ref,
                        h_out_ref, c_out_ref, xh_ref, *, H, Dxp):
    """One LSTM layer per grid step; xh_ref carries the layer input across steps.

    Shapes (padded / lane aligned):
      x_ref    : (Bp, Dxp)          bf16, padded external input (layer 0 only)
      h0_ref   : (Bp, Hp)           f32, this layer's initial h
      c0_ref   : (Bp, Hp)           f32, this layer's initial c
      w_ref    : (Dxp + Hp, Ng)     bf16, fused [W_ih; W_hh], gates packed [i|f|g|o]
      b_ref    : (1, Ng)            f32, fused b_ih + b_hh
      h_out_ref: (Bp, Hp)           f32
      c_out_ref: (Bp, Hp)           f32
      xh_ref   : (Bp, Dxp + Hp)     bf16 VMEM scratch, persistent across grid steps
    """
    layer = pl.program_id(0)
    last = pl.num_programs(0) - 1
    bp, hp = h_out_ref.shape

    # Layer 0 consumes the external input (already bf16 and zero padded to Dxp).
    @pl.when(layer == 0)
    def _():
        xh_ref[:, :Dxp] = x_ref[...]

    # This layer's recurrent state -> trailing Hp lanes of the fused operand.
    xh_ref[:, Dxp:] = h0_ref[...].astype(xh_ref.dtype)

    # One MXU contraction: (Bp, Dxp+Hp) bf16 @ (Dxp+Hp, Ng) bf16 -> f32 acc.
    gates = jnp.dot(xh_ref[...], w_ref[...],
                    preferred_element_type=jnp.float32) + b_ref[...]

    # Gates packed contiguously at stride H (torch.nn.LSTMCell order).
    i_g = jax.nn.sigmoid(gates[:, 0 * H:1 * H])
    f_g = jax.nn.sigmoid(gates[:, 1 * H:2 * H])
    g_g = jnp.tanh(gates[:, 2 * H:3 * H])
    o_g = jax.nn.sigmoid(gates[:, 3 * H:4 * H])

    c_new = f_g * c0_ref[...][:, :H] + i_g * g_g
    h_new = o_g * jnp.tanh(c_new)

    # Full-width, lane-aligned stores.  Zero-padding the tail keeps the padded
    # state exactly 0, so padded state can be chained across timesteps safely.
    if H < hp:  # static (trace-time) branch
        pad = jnp.zeros((bp, hp - H), jnp.float32)
        h_store = jnp.concatenate([h_new, pad], axis=-1)
        c_store = jnp.concatenate([c_new, pad], axis=-1)
    else:
        h_store, c_store = h_new, c_new
    h_out_ref[...] = h_store
    c_out_ref[...] = c_store

    # This layer's h becomes the next layer's input (dropout p=0 == identity).
    # Stale lanes of the layer-0 input slot beyond Hp multiply zero weight rows,
    # so no re-zeroing is needed; skip the store entirely on the last layer.
    @pl.when(layer < last)
    def _():
        xh_ref[:, :hp] = h_store.astype(xh_ref.dtype)


@functools.partial(jax.jit, static_argnames=("h_real",))
def _stacked_lstm_call(x_p, h0_p, c0_p, w_fused, b_fused, *, h_real):
    L, bp, hp = h0_p.shape
    dxp = x_p.shape[-1]
    ngate = w_fused.shape[-1]

    kernel = functools.partial(stacked_lstm_kernel, H=h_real, Dxp=dxp)

    # Explicit VMEM budget: double-buffered blocks + persistent scratch + slack.
    blk_bytes = (bp * dxp * 2              # x (bf16)
                 + 2 * bp * hp * 4         # h0, c0 (f32)
                 + (dxp + hp) * ngate * 2  # W (bf16)
                 + ngate * 4               # b (f32)
                 + 2 * bp * hp * 4)        # h_out, c_out (f32)
    scratch_bytes = bp * (dxp + hp) * 2
    vmem_limit = min(max(4 * blk_bytes + scratch_bytes + (1 << 20), 16 << 20),
                     48 << 20)

    h1_p, c1_p = pl.pallas_call(
        kernel,
        out_shape=(
            jax.ShapeDtypeStruct((L, bp, hp), jnp.float32),
            jax.ShapeDtypeStruct((L, bp, hp), jnp.float32),
        ),
        grid_spec=pltpu.PrefetchScalarGridSpec(
            num_scalar_prefetch=0,
            grid=(L,),
            in_specs=[
                pl.BlockSpec((bp, dxp), lambda l: (0, 0)),                # x
                pl.BlockSpec((None, bp, hp), lambda l: (l, 0, 0)),        # h0[l]
                pl.BlockSpec((None, bp, hp), lambda l: (l, 0, 0)),        # c0[l]
                pl.BlockSpec((None, dxp + hp, ngate), lambda l: (l, 0, 0)),  # W[l]
                pl.BlockSpec((None, 1, ngate), lambda l: (l, 0, 0)),      # b[l]
            ],
            out_specs=(
                pl.BlockSpec((None, bp, hp), lambda l: (l, 0, 0)),        # h1[l]
                pl.BlockSpec((None, bp, hp), lambda l: (l, 0, 0)),        # c1[l]
            ),
            scratch_shapes=[pltpu.VMEM((bp, dxp + hp), jnp.bfloat16)],    # xh carry
        ),
        compiler_params=pltpu.CompilerParams(
            dimension_semantics=("arbitrary",),   # layers are sequential
            vmem_limit_bytes=vmem_limit),
    )(x_p, h0_p, c0_p, w_fused, b_fused)
    return h1_p, c1_p


# ---------------------------------------------------------------------------
# Parameter container mirroring the PyTorch module.
# ---------------------------------------------------------------------------
class StackedLSTMParams:
    def __init__(self, key, input_siz, rnn_siz, nb_layers, dropout=0.0):
        self.input_siz = input_siz
        self.rnn_siz = rnn_siz
        self.nb_layers = nb_layers
        self.dropout = dropout  # only p=0 (identity) supported in-kernel

        H = rnn_siz
        self.Hp = _round_up(H, 128)
        self.Dxp = _round_up(max(input_siz, H), 128)
        self.Ngate = _round_up(4 * H, 128)

        # Per-layer un-fused f32 params (source of truth / pure-JAX reference).
        self.layers = []
        bound = 1.0 / (rnn_siz ** 0.5)
        in_dim = input_siz
        for _ in range(nb_layers):
            key, k1, k2, k3, k4 = jax.random.split(key, 5)
            # torch.nn.LSTMCell: weight_ih (4H, in_dim), weight_hh (4H, H).
            w_ih = jax.random.uniform(k1, (4 * H, in_dim), jnp.float32,
                                      minval=-bound, maxval=bound).T
            w_hh = jax.random.uniform(k2, (4 * H, H), jnp.float32,
                                      minval=-bound, maxval=bound).T
            b_ih = jax.random.uniform(k3, (4 * H,), jnp.float32,
                                      minval=-bound, maxval=bound)
            b_hh = jax.random.uniform(k4, (4 * H,), jnp.float32,
                                      minval=-bound, maxval=bound)
            bias = (b_ih + b_hh).reshape(1, 4 * H)
            self.layers.append((w_ih, w_hh, bias))
            in_dim = H

        # Fused, padded kernel weights (bf16), gates packed contiguously:
        #   w_fused[l, :d_l, :4H]        = W_ih_l^T
        #   w_fused[l, Dxp:Dxp+H, :4H]   = W_hh_l^T
        # all other rows/cols are zero (so stale/padded xh lanes are harmless).
        Dxp, Hp, Ng, L = self.Dxp, self.Hp, self.Ngate, nb_layers
        w_f = jnp.zeros((L, Dxp + Hp, Ng), jnp.float32)
        b_f = jnp.zeros((L, 1, Ng), jnp.float32)
        for l, (w_ih_t, w_hh_t, bias) in enumerate(self.layers):
            d_l = w_ih_t.shape[0]
            w_f = w_f.at[l, :d_l, :4 * H].set(w_ih_t)
            w_f = w_f.at[l, Dxp:Dxp + H, :4 * H].set(w_hh_t)
            b_f = b_f.at[l, 0, :4 * H].set(bias[0])
        self.w_fused = w_f.astype(jnp.bfloat16)  # weight streaming = dominant cost
        self.b_fused = b_f                       # bias stays f32 (post-acc add)

    def get_init_hx(self, batch_size):
        h0 = [jnp.zeros((batch_size, self.rnn_siz), jnp.float32)
              for _ in range(self.nb_layers)]
        c0 = [jnp.zeros((batch_size, self.rnn_siz), jnp.float32)
              for _ in range(self.nb_layers)]
        return h0, c0

    def step_padded(self, x_p, h0_p, c0_p):
        """Hot-path entry: padded (Bp,Dxp)/(L,Bp,Hp) in, padded out.

        Callers running a timestep loop should keep state in this padded form so
        the pad/slice host ops run once per sequence, not once per step.
        """
        return _stacked_lstm_call(x_p, h0_p, c0_p, self.w_fused, self.b_fused,
                                  h_real=self.rnn_siz)

    def forward(self, inp, hidden):
        """Matches StackedLSTM.forward with dropout p=0 (identity)."""
        h_0, c_0 = hidden
        B = inp.shape[0]
        H, Hp, Dxp, L = self.rnn_siz, self.Hp, self.Dxp, self.nb_layers
        Bp = _round_up(B, 16)  # bf16 sublane tile is (16, 128)

        # Zero-pad to lane/sublane aligned shapes (API boundary only).
        x_p = (jnp.zeros((Bp, Dxp), jnp.bfloat16)
               .at[:B, :self.input_siz].set(inp.astype(jnp.bfloat16)))
        h0_p = jnp.zeros((L, Bp, Hp), jnp.float32).at[:, :B, :H].set(
            jnp.stack(h_0))
        c0_p = jnp.zeros((L, Bp, Hp), jnp.float32).at[:, :B, :H].set(
            jnp.stack(c_0))

        h1_p, c1_p = self.step_padded(x_p, h0_p, c0_p)

        h_1 = h1_p[:, :B, :H]
        c_1 = c1_p[:, :B, :H]
        out = h_1[L - 1]  # dropout(p=0) == identity
        return out, (h_1, c_1)


# ---------------------------------------------------------------------------
# Pure-JAX f32 reference (same math, un-fused / un-padded).
# ---------------------------------------------------------------------------
def _reference_forward(params, inp, hidden):
    h_0, c_0 = hidden
    H = params.rnn_siz
    h_1, c_1 = [], []
    for i, (w_ih, w_hh, bias) in enumerate(params.layers):
        gates = inp @ w_ih + h_0[i] @ w_hh + bias
        i_g = jax.nn.sigmoid(gates[:, 0 * H:1 * H])
        f_g = jax.nn.sigmoid(gates[:, 1 * H:2 * H])
        g_g = jnp.tanh(gates[:, 2 * H:3 * H])
        o_g = jax.nn.sigmoid(gates[:, 3 * H:4 * H])
        c_i = f_g * c_0[i] + i_g * g_g
        h_i = o_g * jnp.tanh(c_i)
        inp = h_i
        h_1.append(h_i)
        c_1.append(c_i)
    return inp, (jnp.stack(h_1), jnp.stack(c_1))


if __name__ == "__main__":
    BATCH = 2
    INPUT_SIZ = 32
    RNN_SIZ = 32
    NB_LAYERS = 2

    key = jax.random.PRNGKey(0)
    key, kp, kx = jax.random.split(key, 3)

    params = StackedLSTMParams(kp, INPUT_SIZ, RNN_SIZ, NB_LAYERS, dropout=0.0)
    x = jax.random.normal(kx, (BATCH, INPUT_SIZ), jnp.float32)
    hidden = params.get_init_hx(BATCH)

    out, (h_1, c_1) = params.forward(x, hidden)
    out = jax.block_until_ready(out)
    h_1 = jax.block_until_ready(h_1)
    c_1 = jax.block_until_ready(c_1)

    # sanity check vs pure-JAX f32 reference (bf16 weights => relaxed tolerance)
    ref_out, (ref_h, ref_c) = _reference_forward(params, x, hidden)
    assert out.shape == (BATCH, RNN_SIZ)
    assert h_1.shape == (NB_LAYERS, BATCH, RNN_SIZ)
    assert c_1.shape == (NB_LAYERS, BATCH, RNN_SIZ)
    assert jnp.allclose(out, ref_out, rtol=2e-2, atol=2e-2)
    assert jnp.allclose(h_1, ref_h, rtol=2e-2, atol=2e-2)
    assert jnp.allclose(c_1, ref_c, rtol=2e-2, atol=2e-2)

    print("KERNEL_OK")
</pallas_src>

<mosaic_0001>
module attributes {stable_mosaic.version = 11 : i64} {
  func.func @stacked_lstm_kernel(%arg0: i32, %arg1: memref<16x128xbf16, #tpu.memory_space<vmem>>, %arg2: memref<1x16x128xf32, #tpu.memory_space<vmem>>, %arg3: memref<1x16x128xf32, #tpu.memory_space<vmem>>, %arg4: memref<1x256x128xbf16, #tpu.memory_space<vmem>>, %arg5: memref<1x1x128xf32, #tpu.memory_space<vmem>>, %arg6: memref<1x16x128xf32, #tpu.memory_space<vmem>>, %arg7: memref<1x16x128xf32, #tpu.memory_space<vmem>>, %arg8: memref<16x256xbf16, #tpu.memory_space<vmem>>) attributes {dimension_semantics = [#tpu.dimension_semantics<arbitrary>], iteration_bounds = array<i64: 2>, scalar_prefetch = 0 : i64, scratch_operands = 1 : i64, tpu.core_type = #tpu.core_type<tc>, window_params = [{pipeline_mode = #tpu.pipeline_mode<synchronous>, transform_indices = @transform_0, window_bounds = array<i64: 16, 128>}, {transform_indices = @transform_1, window_bounds = array<i64: 1, 16, 128>}, {transform_indices = @transform_2, window_bounds = array<i64: 1, 16, 128>}, {transform_indices = @transform_3, window_bounds = array<i64: 1, 256, 128>}, {transform_indices = @transform_4, window_bounds = array<i64: 1, 1, 128>}, {transform_indices = @transform_5, window_bounds = array<i64: 1, 16, 128>}, {transform_indices = @transform_6, window_bounds = array<i64: 1, 16, 128>}]} {
    %c0_i32 = arith.constant 0 : i32
    %0 = arith.cmpi eq, %arg0, %c0_i32 : i32
    %1 = arith.extui %0 : i1 to i32
    %c0_i32_0 = arith.constant 0 : i32
    %2 = arith.cmpi ne, %1, %c0_i32_0 : i32
    scf.if %2 {
      %c0_26 = arith.constant 0 : index
      %c0_27 = arith.constant 0 : index
      %55 = vector.load %arg1[%c0_26, %c0_27] : memref<16x128xbf16, #tpu.memory_space<vmem>>, vector<16x128xbf16>
      %c0_28 = arith.constant 0 : index
      %c0_29 = arith.constant 0 : index
      %56 = vector.load %arg8[%c0_28, %c0_29] : memref<16x256xbf16, #tpu.memory_space<vmem>>, vector<16x128xbf16>
      tpu.vector_store %arg8[%c0_28, %c0_29], %55 {strides = array<i32>} : memref<16x256xbf16, #tpu.memory_space<vmem>>, vector<16x128xbf16>,
    } else {
    }
    %c0 = arith.constant 0 : index
    %c0_1 = arith.constant 0 : index
    %c0_2 = arith.constant 0 : index
    %3 = vector.load %arg2[%c0, %c0_1, %c0_2] : memref<1x16x128xf32, #tpu.memory_space<vmem>>, vector<1x16x128xf32>
    %4 = vector.shape_cast %3 : vector<1x16x128xf32> to vector<16x128xf32>
    %5 = arith.truncf %4 : vector<16x128xf32> to vector<16x128xbf16>
    %c0_3 = arith.constant 0 : index
    %c128 = arith.constant 128 : index
    %6 = vector.load %arg8[%c0_3, %c128] : memref<16x256xbf16, #tpu.memory_space<vmem>>, vector<16x128xbf16>
    tpu.vector_store %arg8[%c0_3, %c128], %5 {strides = array<i32>} : memref<16x256xbf16, #tpu.memory_space<vmem>>, vector<16x128xbf16>,
    %c0_4 = arith.constant 0 : index
    %c0_5 = arith.constant 0 : index
    %7 = vector.load %arg8[%c0_4, %c0_5] : memref<16x256xbf16, #tpu.memory_space<vmem>>, vector<16x256xbf16>
    %c0_6 = arith.constant 0 : index
    %c0_7 = arith.constant 0 : index
    %c0_8 = arith.constant 0 : index
    %8 = vector.load %arg4[%c0_6, %c0_7, %c0_8] : memref<1x256x128xbf16, #tpu.memory_space<vmem>>, vector<1x256x128xbf16>
    %9 = vector.shape_cast %8 : vector<1x256x128xbf16> to vector<256x128xbf16>
    %cst = arith.constant dense<0.000000e+00> : vector<16x128xf32>
    %10 = tpu.matmul %7, %9, %cst {dimension_numbers = #tpu.dot_dimension_numbers<[1], [0], [0], [1], [0, 0, 1, 1], [], []>} : vector<16x256xbf16>, vector<256x128xbf16>, vector<16x128xf32> -> vector<16x128xf32>
    %c0_9 = arith.constant 0 : index
    %c0_10 = arith.constant 0 : index
    %c0_11 = arith.constant 0 : index
    %11 = vector.load %arg5[%c0_9, %c0_10, %c0_11] : memref<1x1x128xf32, #tpu.memory_space<vmem>>, vector<1x1x128xf32>
    %12 = vector.shape_cast %11 : vector<1x1x128xf32> to vector<1x128xf32>
    %13 = vector.broadcast %12 : vector<1x128xf32> to vector<16x128xf32>
    %14 = arith.addf %10, %13 : vector<16x128xf32>
    %15 = vector.extract_strided_slice %14 {offsets = [0, 0], sizes = [16, 32], strides = [1, 1]} : vector<16x128xf32> to vector<16x32xf32>
    %16 = arith.negf %15 : vector<16x32xf32>
    %17 = math.exp %16 : vector<16x32xf32>
    %cst_12 = arith.constant 1.000000e+00 : f32
    %18 = vector.broadcast %cst_12 : f32 to vector<16x32xf32>
    %19 = arith.addf %18, %17 : vector<16x32xf32>
    %20 = arith.divf %18, %19 : vector<16x32xf32>
    %21 = vector.extract_strided_slice %14 {offsets = [0, 32], sizes = [16, 32], strides = [1, 1]} : vector<16x128xf32> to vector<16x32xf32>
    %22 = arith.negf %21 : vector<16x32xf32>
    %23 = math.exp %22 : vector<16x32xf32>
    %cst_13 = arith.constant 1.000000e+00 : f32
    %24 = vector.broadcast %cst_13 : f32 to vector<16x32xf32>
    %25 = arith.addf %24, %23 : vector<16x32xf32>
    %26 = arith.divf %24, %25 : vector<16x32xf32>
    %27 = vector.extract_strided_slice %14 {offsets = [0, 64], sizes = [16, 32], strides = [1, 1]} : vector<16x128xf32> to vector<16x32xf32>
    %28 = math.tanh %27 : vector<16x32xf32>
    %29 = vector.extract_strided_slice %14 {offsets = [0, 96], sizes = [16, 32], strides = [1, 1]} : vector<16x128xf32> to vector<16x32xf32>
    %30 = arith.negf %29 : vector<16x32xf32>
    %31 = math.exp %30 : vector<16x32xf32>
    %cst_14 = arith.constant 1.000000e+00 : f32
    %32 = vector.broadcast %cst_14 : f32 to vector<16x32xf32>
    %33 = arith.addf %32, %31 : vector<16x32xf32>
    %34 = arith.divf %32, %33 : vector<16x32xf32>
    %c0_15 = arith.constant 0 : index
    %c0_16 = arith.constant 0 : index
    %c0_17 = arith.constant 0 : index
    %35 = vector.load %arg3[%c0_15, %c0_16, %c0_17] : memref<1x16x128xf32, #tpu.memory_space<vmem>>, vector<1x16x128xf32>
    %36 = vector.shape_cast %35 : vector<1x16x128xf32> to vector<16x128xf32>
    %37 = vector.extract_strided_slice %36 {offsets = [0, 0], sizes = [16, 32], strides = [1, 1]} : vector<16x128xf32> to vector<16x32xf32>
    %38 = arith.mulf %26, %37 : vector<16x32xf32>
    %39 = arith.mulf %20, %28 : vector<16x32xf32>
    %40 = arith.addf %38, %39 : vector<16x32xf32>
    %41 = math.tanh %40 : vector<16x32xf32>
    %42 = arith.mulf %34, %41 : vector<16x32xf32>
    %cst_18 = arith.constant 0.000000e+00 : f32
    %43 = vector.broadcast %cst_18 : f32 to vector<16x96xf32>
    %44 = tpu.concatenate %42, %43 in 1 : vector<16x32xf32>, vector<16x96xf32> -> vector<16x128xf32>
    %45 = tpu.concatenate %40, %43 in 1 : vector<16x32xf32>, vector<16x96xf32> -> vector<16x128xf32>
    %c0_19 = arith.constant 0 : index
    %c0_20 = arith.constant 0 : index
    %c0_21 = arith.constant 0 : index
    %46 = vector.load %arg6[%c0_19, %c0_20, %c0_21] : memref<1x16x128xf32, #tpu.memory_space<vmem>>, vector<1x16x128xf32>
    %47 = vector.shape_cast %46 : vector<1x16x128xf32> to vector<16x128xf32>
    %48 = vector.shape_cast %44 : vector<16x128xf32> to vector<1x16x128xf32>
    tpu.vector_store %arg6[%c0_19, %c0_20, %c0_21], %48 {strides = array<i32>} : memref<1x16x128xf32, #tpu.memory_space<vmem>>, vector<1x16x128xf32>,
    %c0_22 = arith.constant 0 : index
    %c0_23 = arith.constant 0 : index
    %c0_24 = arith.constant 0 : index
    %49 = vector.load %arg7[%c0_22, %c0_23, %c0_24] : memref<1x16x128xf32, #tpu.memory_space<vmem>>, vector<1x16x128xf32>
    %50 = vector.shape_cast %49 : vector<1x16x128xf32> to vector<16x128xf32>
    %51 = vector.shape_cast %45 : vector<16x128xf32> to vector<1x16x128xf32>
    tpu.vector_store %arg7[%c0_22, %c0_23, %c0_24], %51 {strides = array<i32>} : memref<1x16x128xf32, #tpu.memory_space<vmem>>, vector<1x16x128xf32>,
    %c1_i32 = arith.constant 1 : i32
    %52 = arith.cmpi slt, %arg0, %c1_i32 : i32
    %53 = arith.extui %52 : i1 to i32
    %c0_i32_25 = arith.constant 0 : i32
    %54 = arith.cmpi ne, %53, %c0_i32_25 : i32
    scf.if %54 {
      %55 = arith.truncf %44 : vector<16x128xf32> to vector<16x128xbf16>
      %c0_26 = arith.constant 0 : index
      %c0_27 = arith.constant 0 : index
      %56 = vector.load %arg8[%c0_26, %c0_27] : memref<16x256xbf16, #tpu.memory_space<vmem>>, vector<16x128xbf16>
      tpu.vector_store %arg8[%c0_26, %c0_27], %55 {strides = array<i32>} : memref<16x256xbf16, #tpu.memory_space<vmem>>, vector<16x128xbf16>,
    } else {
    }
    return
  }
  func.func @transform_0(%arg0: i32) -> (i32, i32) {
    %c0_i32 = arith.constant 0 : i32
    %c0_i32_0 = arith.constant 0 : i32
    %c0_i32_1 = arith.constant 0 : i32
    return %c0_i32, %c0_i32_0 : i32, i32
  }
  func.func @transform_1(%arg0: i32) -> (i32, i32, i32) {
    %c0_i32 = arith.constant 0 : i32
    %c0_i32_0 = arith.constant 0 : i32
    %c0_i32_1 = arith.constant 0 : i32
    return %arg0, %c0_i32, %c0_i32_0 : i32, i32, i32
  }
  func.func @transform_2(%arg0: i32) -> (i32, i32, i32) {
    %c0_i32 = arith.constant 0 : i32
    %c0_i32_0 = arith.constant 0 : i32
    %c0_i32_1 = arith.constant 0 : i32
    return %arg0, %c0_i32, %c0_i32_0 : i32, i32, i32
  }
  func.func @transform_3(%arg0: i32) -> (i32, i32, i32) {
    %c0_i32 = arith.constant 0 : i32
    %c0_i32_0 = arith.constant 0 : i32
    %c0_i32_1 = arith.constant 0 : i32
    return %arg0, %c0_i32, %c0_i32_0 : i32, i32, i32
  }
  func.func @transform_4(%arg0: i32) -> (i32, i32, i32) {
    %c0_i32 = arith.constant 0 : i32
    %c0_i32_0 = arith.constant 0 : i32
    %c0_i32_1 = arith.constant 0 : i32
    return %arg0, %c0_i32, %c0_i32_0 : i32, i32, i32
  }
  func.func @transform_5(%arg0: i32) -> (i32, i32, i32) {
    %c0_i32 = arith.constant 0 : i32
    %c0_i32_0 = arith.constant 0 : i32
    %c0_i32_1 = arith.constant 0 : i32
    return %arg0, %c0_i32, %c0_i32_0 : i32, i32, i32
  }
  func.func @transform_6(%arg0: i32) -> (i32, i32, i32) {
    %c0_i32 = arith.constant 0 : i32
    %c0_i32_0 = arith.constant 0 : i32
    %c0_i32_1 = arith.constant 0 : i32
    return %arg0, %c0_i32, %c0_i32_0 : i32, i32, i32
  }
}

</mosaic_0001>

<llo_original>
// kernel: _stacked_lstm_call.1
$region0: #{_stacked_lstm_call.1}
  #allocation0 [shape = 'u32[]', space=smem, size = 0x4, offset = 0x4, fixed_abs, tag = 'smem constant byte address 0x4 - core index']
  #allocation1 [shape = 'u32[144,128]{1,0:T(1,128)}', space=vmem, size = 0x12000, scoped, tag = 'internal scratch']
  #allocation2 [shape = 'bf16[16,256]{1,0:T(16,128)(2,1)}', space=vmem, size = 0x2000, scoped, tag = 'scratch operand']
  %s0 = inlined_call_operand.hbm [shape: bf16[16,128], index: 0, kind: input, shape index: {}]
  %s1 = inlined_call_operand.hbm [shape: f32[2,16,128], index: 1, kind: input, shape index: {}]
  %s2 = inlined_call_operand.hbm [shape: f32[2,16,128], index: 2, kind: input, shape index: {}]
  %s3 = inlined_call_operand.hbm [shape: bf16[2,256,128], index: 3, kind: input, shape index: {}]
  %s4 = inlined_call_operand.vmem [shape: f32[2,1,128], index: 4, kind: input, shape index: {}]
  %s5 = inlined_call_operand.hbm [shape: f32[2,16,128], index: 5, kind: output, shape index: {0}]
  %s6 = inlined_call_operand.hbm [shape: f32[2,16,128], index: 6, kind: output, shape index: {1}]
  %7 = xla_tuple %s5, %s6
  %s8 = sld [smem:[#allocation0]]
  $region85: #{_stacked_lstm_call.1} parent=0
    _
  %s10 = ssub.s32 1, %s8
  %s11 = scalar_select 0, %s10, %s8
  $region1: #{_stacked_lstm_call.1} parent=0
    #allocation3 [shape = 'u8[4096]{0}', space=vmem, size = 0x1000, scoped, tag = 'input window, operand 0, single buffered']
    #allocation4 [shape = 's32[2]{0}', space=sflag, size = 0x8, scoped, tag = 'scoped memory for _stacked_lstm_call.1']
    #allocation5 [shape = 's32[2]{0}', space=sflag, size = 0x8, scoped, tag = 'scoped memory for _stacked_lstm_call.1']
    #allocation6 [shape = 'u8[16384]{0}', space=vmem, size = 0x4000, scoped, tag = 'input window, operand 1']
    #allocation7 [shape = 's32[2]{0}', space=sflag, size = 0x8, scoped, tag = 'scoped memory for _stacked_lstm_call.1']
    #allocation8 [shape = 'u8[16384]{0}', space=vmem, size = 0x4000, scoped, tag = 'input window, operand 2']
    #allocation9 [shape = 'u8[131072]{0}', space=vmem, size = 0x20000, scoped, tag = 'input window, operand 3']
    #allocation10 [shape = 's32[2]{0}', space=sflag, size = 0x8, scoped, tag = 'scoped memory for _stacked_lstm_call.1']
    #allocation11 [shape = 'u8[16384]{0}', space=vmem, size = 0x4000, scoped, tag = 'output window, operand 0']
    #allocation12 [shape = 'u8[16384]{0}', space=vmem, size = 0x4000, scoped, tag = 'output window, operand 1']
    #allocation13 [shape = 's32[2]{0}', space=sflag, size = 0x8, scoped, tag = 'scoped memory for _stacked_lstm_call.1']
    %12 = vsyncpa [#allocation4], 0
    %13 = vsyncpa [#allocation7], 0
    %s14 = scalar_lea.sflag [#allocation7], 1
    %15 = vsyncpa %s14, 0
    %16 = vsyncpa [#allocation10], 0
    %s17 = scalar_lea.sflag [#allocation10], 1
    %18 = vsyncpa %s17, 0
    %19 = vsyncpa [#allocation5], 0
    %s20 = scalar_lea.sflag [#allocation5], 1
    %21 = vsyncpa %s20, 0
    %22 = vsyncpa [#allocation13], 0
    %s23 = scalar_lea.sflag [#allocation13], 1
    %24 = vsyncpa %s23, 0
    loop: start=0, step=1, limit=4
    $region2: #{_stacked_lstm_call.1} parent=1 // loop_pre_header
      _
    $region3: #{_stacked_lstm_call.1} parent=1 // loop_header
      %s26 = sphi 0, %s30
      %p27 = scmp.ge.s32.totalorder %s26, 4
      %s34 = sphi 0, %s34
      %s36 = sphi 0, %s34
      %s37 = sphi 0, %s36
      %s51 = sphi 0, %s37
      %s57 = sphi 0, %s59
      %s60 = sphi 0, %s57
      %s61 = sphi 0, %s60
      %s77 = sphi 0, %s61
      %s83 = sphi 0, %s85
      %s86 = sphi 0, %s83
      %s87 = sphi 0, %s86
      %s103 = sphi 0, %s87
      %s109 = sphi 0, %s111
      %s112 = sphi 0, %s109
      %s113 = sphi 0, %s112
      %s129 = sphi 0, %s113
      %s135 = sphi 0, %s137
      %s138 = sphi 0, %s135
      %s139 = sphi 0, %s138
      %s155 = sphi 0, %s139
      %s161 = sphi 0, %s163
      %s164 = sphi 0, %s161
      %s165 = sphi 0, %s164
      %s181 = sphi 0, %s165
      %s187 = sphi 0, %s189
      %s190 = sphi 0, %s187
      %s191 = sphi 0, %s190
      %s207 = sphi 0, %s191
    $region4: #{_stacked_lstm_call.1} parent=1 // loop_header_branch
      %29 = sbr.rel (%p27) target = $region8
    $region5: #{_stacked_lstm_call.1} parent=1 // loop_body
      %s31 = ssub.s32 %s26, 1
      %s32 = ssub.s32 %s26, 2
      %s33 = sadd.s32 %s26, 1
      %s35 = sadd.s32 %s34, 1
      %p38 = scmp.eq.s32.totalorder %s26, 1
      %p39 = scmp.ne.s32.totalorder %s34, %s36
      %p40 = scmp.eq.s32.totalorder %s26, 0
      %p41 = por %p39, %p40
      %p42 = scmp.ne.s32.totalorder %s34, %s36
      %p43 = scmp.eq.s32.totalorder %s31, 1
      %p44 = por %p42, %p43
      %p45 = scmp.ne.s32.totalorder %s36, %s37
      %p46 = scmp.eq.s32.totalorder %s31, 0
      %p47 = por %p45, %p46
      %p48 = scmp.ne.s32.totalorder %s36, %s37
      %p49 = scmp.eq.s32.totalorder %s32, 1
      %p50 = por %p48, %p49
      %p52 = scmp.ne.s32.totalorder %s37, %s51
      %p53 = scmp.eq.s32.totalorder %s32, 0
      %p54 = por %p52, %p53
      %s55 = ssub.s32 %s26, %s33
      %p56 = scmp.eq.s32.totalorder %s55, 0
      %s58 = sadd.s32 %s57, 1
      %s59 = scalar_select %p56, %s57, %s58
      %p62 = pneg %p56
      %p63 = scmp.eq.s32.totalorder %s26, 1
      %p64 = por %p62, %p63
      %p65 = scmp.ne.s32.totalorder %s57, %s60
      %p66 = scmp.eq.s32.totalorder %s26, 0
      %p67 = por %p65, %p66
      %p68 = scmp.ne.s32.totalorder %s57, %s60
      %p69 = scmp.eq.s32.totalorder %s31, 1
      %p70 = por %p68, %p69
      %p71 = scmp.ne.s32.totalorder %s60, %s61
      %p72 = scmp.eq.s32.totalorder %s31, 0
      %p73 = por %p71, %p72
      %p74 = scmp.ne.s32.totalorder %s60, %s61
      %p75 = scmp.eq.s32.totalorder %s32, 1
      %p76 = por %p74, %p75
      %p78 = scmp.ne.s32.totalorder %s61, %s77
      %p79 = scmp.eq.s32.totalorder %s32, 0
      %p80 = por %p78, %p79
      %s81 = ssub.s32 %s26, %s33
      %p82 = scmp.eq.s32.totalorder %s81, 0
      %s84 = sadd.s32 %s83, 1
      %s85 = scalar_select %p82, %s83, %s84
      %p88 = pneg %p82
      %p89 = scmp.eq.s32.totalorder %s26, 1
      %p90 = por %p88, %p89
      %p91 = scmp.ne.s32.totalorder %s83, %s86
      %p92 = scmp.eq.s32.totalorder %s26, 0
      %p93 = por %p91, %p92
      %p94 = scmp.ne.s32.totalorder %s83, %s86
      %p95 = scmp.eq.s32.totalorder %s31, 1
      %p96 = por %p94, %p95
      %p97 = scmp.ne.s32.totalorder %s86, %s87
      %p98 = scmp.eq.s32.totalorder %s31, 0
      %p99 = por %p97, %p98
      %p100 = scmp.ne.s32.totalorder %s86, %s87
      %p101 = scmp.eq.s32.totalorder %s32, 1
      %p102 = por %p100, %p101
      %p104 = scmp.ne.s32.totalorder %s87, %s103
      %p105 = scmp.eq.s32.totalorder %s32, 0
      %p106 = por %p104, %p105
      %s107 = ssub.s32 %s26, %s33
      %p108 = scmp.eq.s32.totalorder %s107, 0
      %s110 = sadd.s32 %s109, 1
      %s111 = scalar_select %p108, %s109, %s110
      %p114 = pneg %p108
      %p115 = scmp.eq.s32.totalorder %s26, 1
      %p116 = por %p114, %p115
      %p117 = scmp.ne.s32.totalorder %s109, %s112
      %p118 = scmp.eq.s32.totalorder %s26, 0
      %p119 = por %p117, %p118
      %p120 = scmp.ne.s32.totalorder %s109, %s112
      %p121 = scmp.eq.s32.totalorder %s31, 1
      %p122 = por %p120, %p121
      %p123 = scmp.ne.s32.totalorder %s112, %s113
      %p124 = scmp.eq.s32.totalorder %s31, 0
      %p125 = por %p123, %p124
      %p126 = scmp.ne.s32.totalorder %s112, %s113
      %p127 = scmp.eq.s32.totalorder %s32, 1
      %p128 = por %p126, %p127
      %p130 = scmp.ne.s32.totalorder %s113, %s129
      %p131 = scmp.eq.s32.totalorder %s32, 0
      %p132 = por %p130, %p131
      %s133 = ssub.s32 %s26, %s33
      %p134 = scmp.eq.s32.totalorder %s133, 0
      %s136 = sadd.s32 %s135, 1
      %s137 = scalar_select %p134, %s135, %s136
      %p140 = pneg %p134
      %p141 = scmp.eq.s32.totalorder %s26, 1
      %p142 = por %p140, %p141
      %p143 = scmp.ne.s32.totalorder %s135, %s138
      %p144 = scmp.eq.s32.totalorder %s26, 0
      %p145 = por %p143, %p144
      %p146 = scmp.ne.s32.totalorder %s135, %s138
      %p147 = scmp.eq.s32.totalorder %s31, 1
      %p148 = por %p146, %p147
      %p149 = scmp.ne.s32.totalorder %s138, %s139
      %p150 = scmp.eq.s32.totalorder %s31, 0
      %p151 = por %p149, %p150
      %p152 = scmp.ne.s32.totalorder %s138, %s139
      %p153 = scmp.eq.s32.totalorder %s32, 1
      %p154 = por %p152, %p153
      %p156 = scmp.ne.s32.totalorder %s139, %s155
      %p157 = scmp.eq.s32.totalorder %s32, 0
      %p158 = por %p156, %p157
      %s159 = ssub.s32 %s26, %s33
      %p160 = scmp.eq.s32.totalorder %s159, 0
      %s162 = sadd.s32 %s161, 1
      %s163 = scalar_select %p160, %s161, %s162
      %p166 = pneg %p160
      %p167 = scmp.eq.s32.totalorder %s26, 1
      %p168 = por %p166, %p167
      %p169 = scmp.ne.s32.totalorder %s161, %s164
      %p170 = scmp.eq.s32.totalorder %s26, 0
      %p171 = por %p169, %p170
      %p172 = scmp.ne.s32.totalorder %s161, %s164
      %p173 = scmp.eq.s32.totalorder %s31, 1
      %p174 = por %p172, %p173
      %p175 = scmp.ne.s32.totalorder %s164, %s165
      %p176 = scmp.eq.s32.totalorder %s31, 0
      %p177 = por %p175, %p176
      %p178 = scmp.ne.s32.totalorder %s164, %s165
      %p179 = scmp.eq.s32.totalorder %s32, 1
      %p180 = por %p178, %p179
      %p182 = scmp.ne.s32.totalorder %s165, %s181
      %p183 = scmp.eq.s32.totalorder %s32, 0
      %p184 = por %p182, %p183
      %s185 = ssub.s32 %s26, %s33
      %p186 = scmp.eq.s32.totalorder %s185, 0
      %s188 = sadd.s32 %s187, 1
      %s189 = scalar_select %p186, %s187, %s188
      %p192 = pneg %p186
      %p193 = scmp.eq.s32.totalorder %s26, 1
      %p194 = por %p192, %p193
      %p195 = scmp.ne.s32.totalorder %s187, %s190
      %p196 = scmp.eq.s32.totalorder %s26, 0
      %p197 = por %p195, %p196
      %p198 = scmp.ne.s32.totalorder %s187, %s190
      %p199 = scmp.eq.s32.totalorder %s31, 1
      %p200 = por %p198, %p199
      %p201 = scmp.ne.s32.totalorder %s190, %s191
      %p202 = scmp.eq.s32.totalorder %s31, 0
      %p203 = por %p201, %p202
      %p204 = scmp.ne.s32.totalorder %s190, %s191
      %p205 = scmp.eq.s32.totalorder %s32, 1
      %p206 = por %p204, %p205
      %p208 = scmp.ne.s32.totalorder %s191, %s207
      %p209 = scmp.eq.s32.totalorder %s32, 0
      %p210 = por %p208, %p209
      %p211 = scmp.le.s32.totalorder 1, %s26
      %p212 = scmp.lt.s32.totalorder %s26, 3
      %p213 = pnand %p211, %p212
      %p214 = pneg %p213
      // Predicated region
      $region9: #{_stacked_lstm_call.1} parent=5 // pred_check
        _
      $region10: #{_stacked_lstm_call.1} parent=5 // pred_check_branch
        %216 = sbr.rel (%p213) target = $region12
      $region11: #{_stacked_lstm_call.1} parent=5 // pred_region
        %s217 = ssub.s32 %s26, 1
        // Predicated region
        $region13: #{_stacked_lstm_call.1} parent=11 // pred_check
          %p218 = pneg %p47
        $region14: #{_stacked_lstm_call.1} parent=11 // pred_check_branch
          %220 = sbr.rel (%p218) target = $region16
        $region15: #{_stacked_lstm_call.1} parent=11 // pred_region
          %s222 = ssub.s32 128, 128
          %223 = vsyncadd [#allocation4], %s222
          %s224 = sshll.u32 [#allocation3], 4
          %s225 = int_to_ptr.vmem [resolvable:$true] %s224
          %230 = dma.hbm_to_vmem [thread:$0]  %s0, 128, %s225, [#allocation4], 64, 64, 4
        $region16: #{_stacked_lstm_call.1} parent=11 // pred_fallthru
          _
      $region12: #{_stacked_lstm_call.1} parent=5 // pred_fallthru
        _
      %p231 = scmp.lt.s32.totalorder %s26, 2
      // Predicated region
      $region17: #{_stacked_lstm_call.1} parent=5 // pred_check
        %p232 = pneg %p231
      $region18: #{_stacked_lstm_call.1} parent=5 // pred_check_branch
        %234 = sbr.rel (%p232) target = $region20
      $region19: #{_stacked_lstm_call.1} parent=5 // pred_region
        // Predicated region
        $region21: #{_stacked_lstm_call.1} parent=19 // pred_check
          %p235 = pneg %p67
        $region22: #{_stacked_lstm_call.1} parent=19 // pred_check_branch
          %237 = sbr.rel (%p235) target = $region24
        $region23: #{_stacked_lstm_call.1} parent=19 // pred_region
          %s238 = sand.u32 %s26, 1
          %s239 = scalar_lea.sflag [#allocation7], %s238
          %s240 = sand.u32 %s57, 1
          %s241 = smul.addr %s240, 16
          %s242 = scalar_lea.vmem [#allocation6], %s241
          %s244 = ssub.s32 256, 256
          %245 = vsyncadd %s239, %s244
          %s246 = smul.addr %s26, 2
          %s247 = smul.addr %s246, 128
          %s248 = scalar_lea.hbm %s1, %s247
          %s249 = sshll.u32 %s242, 4
          %s250 = int_to_ptr.vmem [resolvable:$true] %s249
          %255 = dma.hbm_to_vmem [thread:$0]  %s248, 256, %s250, %s239, 128, 128, 8
        $region24: #{_stacked_lstm_call.1} parent=19 // pred_fallthru
          _
        // Predicated region
        $region25: #{_stacked_lstm_call.1} parent=19 // pred_check
          %p256 = pneg %p93
        $region26: #{_stacked_lstm_call.1} parent=19 // pred_check_branch
          %258 = sbr.rel (%p256) target = $region28
        $region27: #{_stacked_lstm_call.1} parent=19 // pred_region
          %s259 = sand.u32 %s26, 1
          %s260 = scalar_lea.sflag [#allocation7], %s259
          %s261 = sand.u32 %s83, 1
          %s262 = smul.addr %s261, 16
          %s263 = scalar_lea.vmem [#allocation8], %s262
          %s265 = ssub.s32 256, 256
          %266 = vsyncadd %s260, %s265
          %s267 = smul.addr %s26, 2
          %s268 = smul.addr %s267, 128
          %s269 = scalar_lea.hbm %s2, %s268
          %s270 = sshll.u32 %s263, 4
          %s271 = int_to_ptr.vmem [resolvable:$true] %s270
          %276 = dma.hbm_to_vmem [thread:$0]  %s269, 256, %s271, %s260, 128, 128, 8
        $region28: #{_stacked_lstm_call.1} parent=19 // pred_fallthru
          _
        // Predicated region
        $region29: #{_stacked_lstm_call.1} parent=19 // pred_check
          %p277 = pneg %p119
        $region30: #{_stacked_lstm_call.1} parent=19 // pred_check_branch
          %279 = sbr.rel (%p277) target = $region32
        $region31: #{_stacked_lstm_call.1} parent=19 // pred_region
          %s280 = sand.u32 %s109, 1
          %s281 = scalar_lea.sflag [#allocation10], %s280
          %s282 = sand.u32 %s109, 1
          %s283 = smul.addr %s282, 128
          %s284 = scalar_lea.vmem [#allocation9], %s283
          %s286 = ssub.s32 2048, 2048
          %287 = vsyncadd %s281, %s286
          %s288 = smul.addr %s26, 32
          %s289 = smul.addr %s288, 64
          %s290 = scalar_lea.hbm %s3, %s289
          %s291 = sshll.u32 %s284, 4
          %s292 = int_to_ptr.vmem [resolvable:$true] %s291
          %297 = dma.hbm_to_vmem [thread:$0]  %s290, 2048, %s292, %s281, 64, 64, 4
        $region32: #{_stacked_lstm_call.1} parent=19 // pred_fallthru
          _
        // Predicated region
        $region33: #{_stacked_lstm_call.1} parent=19 // pred_check
          %p298 = pneg %p145
        $region34: #{_stacked_lstm_call.1} parent=19 // pred_check_branch
          %300 = sbr.rel (%p298) target = $region36
        $region35: #{_stacked_lstm_call.1} parent=19 // pred_region
          %p301 = scmp.lt.s32.totalorder %s26, 1
          %s302 = scalar_select %p301, %s26, 1
          %s303 = scalar_lea.vmem %s4, %s302
        $region36: #{_stacked_lstm_call.1} parent=19 // pred_fallthru
          _
      $region20: #{_stacked_lstm_call.1} parent=5 // pred_fallthru
        _
      %p304 = scmp.le.s32.totalorder 1, %s26
      %p305 = scmp.lt.s32.totalorder %s26, 3
      %p306 = pnand %p304, %p305
      %p307 = pneg %p306
      // Predicated region
      $region37: #{_stacked_lstm_call.1} parent=5 // pred_check
        _
      $region38: #{_stacked_lstm_call.1} parent=5 // pred_check_branch
        %309 = sbr.rel (%p306) target = $region40
      $region39: #{_stacked_lstm_call.1} parent=5 // pred_region
        %s310 = ssub.s32 %s26, 1
        // Predicated region
        $region41: #{_stacked_lstm_call.1} parent=39 // pred_check
          %p311 = pneg %p47
        $region42: #{_stacked_lstm_call.1} parent=39 // pred_check_branch
          %313 = sbr.rel (%p311) target = $region44
        $region43: #{_stacked_lstm_call.1} parent=39 // pred_region
          %314 = dma.done [#allocation4], 128
        $region44: #{_stacked_lstm_call.1} parent=39 // pred_fallthru
          _
        %s315 = sand.u32 %s31, 1
        %s316 = scalar_lea.sflag [#allocation7], %s315
        %s317 = sand.u32 %s60, 1
        %s318 = smul.addr %s317, 16
        %s319 = scalar_lea.vmem [#allocation6], %s318
        // Predicated region
        $region45: #{_stacked_lstm_call.1} parent=39 // pred_check
          %p320 = pneg %p73
        $region46: #{_stacked_lstm_call.1} parent=39 // pred_check_branch
          %322 = sbr.rel (%p320) target = $region48
        $region47: #{_stacked_lstm_call.1} parent=39 // pred_region
          %323 = dma.done %s316, 256
        $region48: #{_stacked_lstm_call.1} parent=39 // pred_fallthru
          _
        %s324 = sand.u32 %s31, 1
        %s325 = scalar_lea.sflag [#allocation7], %s324
        %s326 = sand.u32 %s86, 1
        %s327 = smul.addr %s326, 16
        %s328 = scalar_lea.vmem [#allocation8], %s327
        // Predicated region
        $region49: #{_stacked_lstm_call.1} parent=39 // pred_check
          %p329 = pneg %p99
        $region50: #{_stacked_lstm_call.1} parent=39 // pred_check_branch
          %331 = sbr.rel (%p329) target = $region52
        $region51: #{_stacked_lstm_call.1} parent=39 // pred_region
          %332 = dma.done %s325, 256
        $region52: #{_stacked_lstm_call.1} parent=39 // pred_fallthru
          _
        %s333 = sand.u32 %s112, 1
        %s334 = scalar_lea.sflag [#allocation10], %s333
        %s335 = sand.u32 %s112, 1
        %s336 = smul.addr %s335, 128
        %s337 = scalar_lea.vmem [#allocation9], %s336
        // Predicated region
        $region53: #{_stacked_lstm_call.1} parent=39 // pred_check
          %p338 = pneg %p125
        $region54: #{_stacked_lstm_call.1} parent=39 // pred_check_branch
          %340 = sbr.rel (%p338) target = $region56
        $region55: #{_stacked_lstm_call.1} parent=39 // pred_region
          %341 = dma.done %s334, 2048
        $region56: #{_stacked_lstm_call.1} parent=39 // pred_fallthru
          _
        %p342 = pneg %p47
        %p343 = pneg %p44
        %s344 = sand.u32 %s31, 1
        %s345 = scalar_lea.sflag [#allocation7], %s344
        %s346 = sand.u32 %s60, 1
        %s347 = smul.addr %s346, 16
        %s348 = scalar_lea.vmem [#allocation6], %s347
        %p349 = pneg %p73
        %p350 = pneg %p70
        %s351 = sand.u32 %s31, 1
        %s352 = scalar_lea.sflag [#allocation7], %s351
        %s353 = sand.u32 %s86, 1
        %s354 = smul.addr %s353, 16
        %s355 = scalar_lea.vmem [#allocation8], %s354
        %p356 = pneg %p99
        %p357 = pneg %p96
        %s358 = sand.u32 %s112, 1
        %s359 = scalar_lea.sflag [#allocation10], %s358
        %s360 = sand.u32 %s112, 1
        %s361 = smul.addr %s360, 128
        %s362 = scalar_lea.vmem [#allocation9], %s361
        %p363 = pneg %p125
        %p364 = pneg %p122
        %p365 = scmp.lt.s32.totalorder %s31, 1
        %s366 = scalar_select %p365, %s31, 1
        %s367 = scalar_lea.vmem %s4, %s366
        %p368 = pneg %p151
        %p369 = pneg %p148
        %p370 = pneg %p177
        %p371 = pneg %p174
        %s372 = sand.u32 %s164, 1
        %s373 = scalar_lea.sflag [#allocation5], %s372
        %s374 = sand.u32 %s164, 1
        %s375 = smul.addr %s374, 16
        %s376 = scalar_lea.vmem [#allocation11], %s375
        %p377 = pneg %p203
        %p378 = pneg %p200
        %s379 = sand.u32 %s190, 1
        %s380 = scalar_lea.sflag [#allocation13], %s379
        %s381 = sand.u32 %s190, 1
        %s382 = smul.addr %s381, 16
        %s383 = scalar_lea.vmem [#allocation12], %s382
        %p384 = scmp.lt.s32.totalorder %s31, 1
        %s385 = scalar_select %p384, %s31, 1
        %s386 = scalar_lea.vmem %s4, %s385
        %p388 = scmp.eq.s32.totalorder %s31, 0
        // Predicated region
        $region57: #{_stacked_lstm_call.1} parent=39 // pred_check
          %p389 = pneg %p388
        $region58: #{_stacked_lstm_call.1} parent=39 // pred_check_branch
          %391 = sbr.rel (%p389) target = $region60
        $region59: #{_stacked_lstm_call.1} parent=39 // pred_region
          %v392 = vld [vmem:[#allocation3] sm:$0xf]
          %v393 = vld [vmem:[#allocation3 + $0x4] sm:$0xf]
          %v396 = vunpack.c.l.b16 %v392
          %v397 = vunpack.c.l.b16 %v393
          %v398 = vpack.c.b16 %v397, %v396
          %400 = vst [vmem:[#allocation2] sm:$0xff] %v398
        $region60: #{_stacked_lstm_call.1} parent=39 // pred_fallthru
          _
        %v401 = vld [vmem:[%s319] sm:$0xff]
        %v402 = vld [vmem:[%s319 + $0x8] sm:$0xff]
        %v403 = vpack.c.bf16 %v402, %v401
        %404 = vst [vmem:[#allocation2 + $0x8] sm:$0xff] %v403
        %v405 = vld [vmem:[#allocation2] sm:$0xff]
        %v406 = vld [vmem:[#allocation2 + $0x8] sm:$0xff]
        %v407 = vld [vmem:[%s337] sm:$0xf]
        %v408 = vld [vmem:[%s337 + $0x4] sm:$0xf]
        %v409 = vld [vmem:[%s337 + $0x8] sm:$0xf]
        %v410 = vld [vmem:[%s337 + $0xc] sm:$0xf]
        %v411 = vld [vmem:[%s337 + $0x10] sm:$0xf]
        %v412 = vld [vmem:[%s337 + $0x14] sm:$0xf]
        %v413 = vld [vmem:[%s337 + $0x18] sm:$0xf]
        %v414 = vld [vmem:[%s337 + $0x1c] sm:$0xf]
        %v415 = vld [vmem:[%s337 + $0x20] sm:$0xf]
        %v416 = vld [vmem:[%s337 + $0x24] sm:$0xf]
        %v417 = vld [vmem:[%s337 + $0x28] sm:$0xf]
        %v418 = vld [vmem:[%s337 + $0x2c] sm:$0xf]
        %v419 = vld [vmem:[%s337 + $0x30] sm:$0xf]
        %v420 = vld [vmem:[%s337 + $0x34] sm:$0xf]
        %v421 = vld [vmem:[%s337 + $0x38] sm:$0xf]
        %v422 = vld [vmem:[%s337 + $0x3c] sm:$0xf]
        %v423 = vld [vmem:[%s337 + $0x40] sm:$0xf]
        %v424 = vld [vmem:[%s337 + $0x44] sm:$0xf]
        %v425 = vld [vmem:[%s337 + $0x48] sm:$0xf]
        %v426 = vld [vmem:[%s337 + $0x4c] sm:$0xf]
        %v427 = vld [vmem:[%s337 + $0x50] sm:$0xf]
        %v428 = vld [vmem:[%s337 + $0x54] sm:$0xf]
        %v429 = vld [vmem:[%s337 + $0x58] sm:$0xf]
        %v430 = vld [vmem:[%s337 + $0x5c] sm:$0xf]
        %v431 = vld [vmem:[%s337 + $0x60] sm:$0xf]
        %v432 = vld [vmem:[%s337 + $0x64] sm:$0xf]
        %v433 = vld [vmem:[%s337 + $0x68] sm:$0xf]
        %v434 = vld [vmem:[%s337 + $0x6c] sm:$0xf]
        %v435 = vld [vmem:[%s337 + $0x70] sm:$0xf]
        %v436 = vld [vmem:[%s337 + $0x74] sm:$0xf]
        %v437 = vld [vmem:[%s337 + $0x78] sm:$0xf]
        %v438 = vld [vmem:[%s337 + $0x7c] sm:$0xf]
        %v439 = vld [vmem:[%s386] sm:$0x1]
        %v441 = vlaneseq
        %v442 = vshrl.u32 %v441, 7
        %v443 = vsub.s32 0, %v442
        %v444 = vrot.slane %v439, %v443
        %v478 = vunpack.c.l.b16 %v407
        %v479 = vunpack.c.l.b16 %v408
        %v480 = vunpack.c.l.b16 %v409
        %v481 = vunpack.c.l.b16 %v410
        %v482 = vunpack.c.l.b16 %v411
        %v483 = vunpack.c.l.b16 %v412
        %v484 = vunpack.c.l.b16 %v413
        %v485 = vunpack.c.l.b16 %v414
        %v486 = vunpack.c.l.b16 %v415
        %v487 = vunpack.c.l.b16 %v416
        %v488 = vunpack.c.l.b16 %v417
        %v489 = vunpack.c.l.b16 %v418
        %v490 = vunpack.c.l.b16 %v419
        %v491 = vunpack.c.l.b16 %v420
        %v492 = vunpack.c.l.b16 %v421
        %v493 = vunpack.c.l.b16 %v422
        %v494 = vunpack.c.l.b16 %v423
        %v495 = vunpack.c.l.b16 %v424
        %v496 = vunpack.c.l.b16 %v425
        %v497 = vunpack.c.l.b16 %v426
        %v498 = vunpack.c.l.b16 %v427
        %v499 = vunpack.c.l.b16 %v428
        %v500 = vunpack.c.l.b16 %v429
        %v501 = vunpack.c.l.b16 %v430
        %v502 = vunpack.c.l.b16 %v431
        %v503 = vunpack.c.l.b16 %v432
        %v504 = vunpack.c.l.b16 %v433
        %v505 = vunpack.c.l.b16 %v434
        %v506 = vunpack.c.l.b16 %v435
        %v507 = vunpack.c.l.b16 %v436
        %v508 = vunpack.c.l.b16 %v437
        %v509 = vunpack.c.l.b16 %v438
        %v510 = vpack.c.b16 %v479, %v478
        %v511 = vpack.c.b16 %v481, %v480
        %v512 = vpack.c.b16 %v483, %v482
        %v513 = vpack.c.b16 %v485, %v484
        %v514 = vpack.c.b16 %v487, %v486
        %v515 = vpack.c.b16 %v489, %v488
        %v516 = vpack.c.b16 %v491, %v490
        %v517 = vpack.c.b16 %v493, %v492
        %v518 = vpack.c.b16 %v495, %v494
        %v519 = vpack.c.b16 %v497, %v496
        %v520 = vpack.c.b16 %v499, %v498
        %v521 = vpack.c.b16 %v501, %v500
        %v522 = vpack.c.b16 %v503, %v502
        %v523 = vpack.c.b16 %v505, %v504
        %v524 = vpack.c.b16 %v507, %v506
        %v525 = vpack.c.b16 %v509, %v508
        %542 = vmatprep.subr.bf16.mxu0 0
        %543 = vmatpush1.bf16.msra.mxu0 %v510
        %544 = vmatprep.subr.bf16.mxu0 0
        %545 = vmatpush1.bf16.msra.mxu0 %v511
        %546 = vmatprep.subr.bf16.mxu0 0
        %547 = vmatpush1.bf16.msra.mxu0 %v512
        %548 = vmatprep.subr.bf16.mxu0 0
        %549 = vmatpush1.bf16.msra.mxu0 %v513
        %550 = vmatprep.subr.bf16.mxu0 0
        %551 = vmatpush1.bf16.msra.mxu0 %v514
        %552 = vmatprep.subr.bf16.mxu0 0
        %553 = vmatpush1.bf16.msra.mxu0 %v515
        %554 = vmatprep.subr.bf16.mxu0 0
        %555 = vmatpush1.bf16.msra.mxu0 %v516
        %556 = vmatprep.subr.bf16.mxu0 0
        %557 = vmatpush1.bf16.msra.mxu0 %v517
        %558 = vmatprep.subr.bf16.mxu0 0
        %559 = vmatpush1.bf16.msra.mxu0 %v518
        %560 = vmatprep.subr.bf16.mxu0 0
        %561 = vmatpush1.bf16.msra.mxu0 %v519
        %562 = vmatprep.subr.bf16.mxu0 0
        %563 = vmatpush1.bf16.msra.mxu0 %v520
        %564 = vmatprep.subr.bf16.mxu0 0
        %565 = vmatpush1.bf16.msra.mxu0 %v521
        %566 = vmatprep.subr.bf16.mxu0 0
        %567 = vmatpush1.bf16.msra.mxu0 %v522
        %568 = vmatprep.subr.bf16.mxu0 0
        %569 = vmatpush1.bf16.msra.mxu0 %v523
        %570 = vmatprep.subr.bf16.mxu0 0
        %571 = vmatpush1.bf16.msra.mxu0 %v524
        %572 = vmatprep.subr.bf16.mxu0 0
        %573 = vmatpush1.bf16.msra.mxu0 %v525
        %574 = vmatprep.mubr.bf16.mxu0 %v406
        %575 = vmatmul.mubr.bf16.gmra.mrb[0].mxu0 %v405
        %v576 = vpop.f32.mrb[0].mxu0
        %v577 = vadd.f32 %v444, %v576
        %v578 = vpop.f32.mrb[0].mxu0
        %v579 = vpop.f32.mrb[0].mxu0
        %v580 = vadd.f32 %v444, %v579
        %v581 = vpop.f32.mrb[0].mxu0
        %582 = vdwg.mxu0
        %v583 = vxor.u32 %v577, 2147483648
        %v584 = vxor.u32 %v580, 2147483648
        %v585 = vmul.f32 %v583, 1.442695
        %v586 = vpow.pop %v585
        %v587 = vmul.f32 %v584, 1.442695
        %v588 = vpow.pop %v587
        %v589 = vadd.f32 %v586, 1.0
        %v590 = vadd.f32 %v588, 1.0
        %v591 = vrcp.pop %v589
        %v592 = vmul.f32 1.0, %v591
        %v593 = vrcp.pop %v590
        %v594 = vmul.f32 1.0, %v593
        %v595 = vtanh.pop %v577
        %v596 = vtanh.pop %v580
        %v597 = vld [vmem:[%s328] sm:$0xff]
        %v598 = vld [vmem:[%s328 + $0x8] sm:$0xff]
        %601 = vrot.lane.b32.xlu0 %v597, 32
        %v602 = vpop.permute.xlu0 %601
        %603 = vrot.lane.b32.xlu0 %v598, 32
        %v604 = vpop.permute.xlu0 %603
        %v607 = vmul.f32 %v592, %v602
        %v608 = vmul.f32 %v594, %v604
        %611 = vrot.lane.b32.xlu0 %v595, 64
        %v612 = vpop.permute.xlu0 %611
        %613 = vrot.lane.b32.xlu0 %v596, 64
        %v614 = vpop.permute.xlu0 %613
        %v617 = vmul.f32 %v592, %v612
        %v618 = vmul.f32 %v594, %v614
        %621 = vrot.lane.b32.xlu0 %v617, 32
        %v622 = vpop.permute.xlu0 %621
        %623 = vrot.lane.b32.xlu0 %v618, 32
        %v624 = vpop.permute.xlu0 %623
        %v627 = vadd.f32 %v607, %v622
        %v628 = vadd.f32 %v608, %v624
        %v629 = vtanh.pop %v627
        %v630 = vtanh.pop %v628
        %633 = vrot.lane.b32.xlu0 %v629, 64
        %v634 = vpop.permute.xlu0 %633
        %635 = vrot.lane.b32.xlu0 %v630, 64
        %v636 = vpop.permute.xlu0 %635
        %v639 = vmul.f32 %v592, %v634
        %v640 = vmul.f32 %v594, %v636
        %643 = vrot.lane.b32.xlu0 %v639, 32
        %v644 = vpop.permute.xlu0 %643
        %645 = vrot.lane.b32.xlu0 %v640, 32
        %v646 = vpop.permute.xlu0 %645
        %vm649 = vcmask 261120
        %v650 = vsel %vm649, %v644, 0.0
        %v651 = vsel %vm649, %v646, 0.0
        %654 = vrot.lane.b32.xlu0 %v627, 96
        %v655 = vpop.permute.xlu0 %654
        %656 = vrot.lane.b32.xlu0 %v628, 96
        %v657 = vpop.permute.xlu0 %656
        %v660 = vsel %vm649, %v655, 0.0
        %v661 = vsel %vm649, %v657, 0.0
        %662 = vst [vmem:[%s376] sm:$0xff] %v650
        %663 = vst [vmem:[%s376 + $0x8] sm:$0xff] %v651
        %664 = vst [vmem:[%s383] sm:$0xff] %v660
        %665 = vst [vmem:[%s383 + $0x8] sm:$0xff] %v661
        %p666 = scmp.lt.s32.totalorder %s31, 1
        // Predicated region
        $region61: #{_stacked_lstm_call.1} parent=39 // pred_check
          %p667 = pneg %p666
        $region62: #{_stacked_lstm_call.1} parent=39 // pred_check_branch
          %669 = sbr.rel (%p667) target = $region64
        $region63: #{_stacked_lstm_call.1} parent=39 // pred_region
          %v670 = vpack.c.bf16 %v651, %v650
          %671 = vst [vmem:[#allocation2] sm:$0xff] %v670
        $region64: #{_stacked_lstm_call.1} parent=39 // pred_fallthru
          _
        %s672 = sand.u32 %s164, 1
        %s673 = scalar_lea.sflag [#allocation5], %s672
        %s674 = sand.u32 %s164, 1
        %s675 = smul.addr %s674, 16
        %s676 = scalar_lea.vmem [#allocation11], %s675
        %s677 = sand.u32 %s190, 1
        %s678 = scalar_lea.sflag [#allocation13], %s677
        %s679 = sand.u32 %s190, 1
        %s680 = smul.addr %s679, 16
        %s681 = scalar_lea.vmem [#allocation12], %s680
        // Predicated region
        $region65: #{_stacked_lstm_call.1} parent=39 // pred_check
          %p682 = pneg %p174
        $region66: #{_stacked_lstm_call.1} parent=39 // pred_check_branch
          %684 = sbr.rel (%p682) target = $region68
        $region67: #{_stacked_lstm_call.1} parent=39 // pred_region
          %s686 = ssub.s32 256, 256
          %687 = vsyncadd %s673, %s686
          %s688 = smul.addr %s31, 2
          %s689 = smul.addr %s688, 128
          %s690 = scalar_lea.hbm %s5, %s689
          %s691 = sshll.u32 %s676, 4
          %s692 = int_to_ptr.vmem [resolvable:$true] %s691
          %697 = dma.vmem_to_hbm [thread:$0]  %s692, 256, %s690, %s673, 128, 128, 8
        $region68: #{_stacked_lstm_call.1} parent=39 // pred_fallthru
          _
        // Predicated region
        $region69: #{_stacked_lstm_call.1} parent=39 // pred_check
          %p698 = pneg %p200
        $region70: #{_stacked_lstm_call.1} parent=39 // pred_check_branch
          %700 = sbr.rel (%p698) target = $region72
        $region71: #{_stacked_lstm_call.1} parent=39 // pred_region
          %s702 = ssub.s32 256, 256
          %703 = vsyncadd %s678, %s702
          %s704 = smul.addr %s31, 2
          %s705 = smul.addr %s704, 128
          %s706 = scalar_lea.hbm %s6, %s705
          %s707 = sshll.u32 %s681, 4
          %s708 = int_to_ptr.vmem [resolvable:$true] %s707
          %713 = dma.vmem_to_hbm [thread:$0]  %s708, 256, %s706, %s678, 128, 128, 8
        $region72: #{_stacked_lstm_call.1} parent=39 // pred_fallthru
          _
      $region40: #{_stacked_lstm_call.1} parent=5 // pred_fallthru
        _
      %p714 = scmp.le.s32.totalorder 2, %s26
      // Predicated region
      $region73: #{_stacked_lstm_call.1} parent=5 // pred_check
        %p715 = pneg %p714
      $region74: #{_stacked_lstm_call.1} parent=5 // pred_check_branch
        %717 = sbr.rel (%p715) target = $region76
      $region75: #{_stacked_lstm_call.1} parent=5 // pred_region
        %s718 = ssub.s32 %s26, 2
        // Predicated region
        $region77: #{_stacked_lstm_call.1} parent=75 // pred_check
          %p719 = pneg %p180
        $region78: #{_stacked_lstm_call.1} parent=75 // pred_check_branch
          %721 = sbr.rel (%p719) target = $region80
        $region79: #{_stacked_lstm_call.1} parent=75 // pred_region
          %s722 = sand.u32 %s165, 1
          %s723 = scalar_lea.sflag [#allocation5], %s722
          %s724 = sand.u32 %s165, 1
          %s725 = smul.addr %s724, 16
          %s726 = scalar_lea.vmem [#allocation11], %s725
          %727 = dma.done %s723, 256
        $region80: #{_stacked_lstm_call.1} parent=75 // pred_fallthru
          _
        // Predicated region
        $region81: #{_stacked_lstm_call.1} parent=75 // pred_check
          %p728 = pneg %p206
        $region82: #{_stacked_lstm_call.1} parent=75 // pred_check_branch
          %730 = sbr.rel (%p728) target = $region84
        $region83: #{_stacked_lstm_call.1} parent=75 // pred_region
          %s731 = sand.u32 %s191, 1
          %s732 = scalar_lea.sflag [#allocation13], %s731
          %s733 = sand.u32 %s191, 1
          %s734 = smul.addr %s733, 16
          %s735 = scalar_lea.vmem [#allocation12], %s734
          %736 = dma.done %s732, 256
        $region84: #{_stacked_lstm_call.1} parent=75 // pred_fallthru
          _
      $region76: #{_stacked_lstm_call.1} parent=5 // pred_fallthru
        _
    $region6: #{_stacked_lstm_call.1} parent=1 // loop_footer
      %s30 = sadd.s32 1, %s26
    $region7: #{_stacked_lstm_call.1} parent=1 // loop_footer_branch
      %25 = sbr.rel target = $region3
    $region8: #{_stacked_lstm_call.1} parent=1 // loop_exit
      _
    %737 = vsyncpa [#allocation4], 1
    %s738 = scalar_lea.sflag [#allocation4], 1
    %739 = vsyncpa %s738, 1
    %740 = vsyncpa [#allocation7], 1
    %s741 = scalar_lea.sflag [#allocation7], 1
    %742 = vsyncpa %s741, 1
    %743 = vsyncpa [#allocation10], 1
    %s744 = scalar_lea.sflag [#allocation10], 1
    %745 = vsyncpa %s744, 1
    %746 = vsyncpa [#allocation5], 1
    %s747 = scalar_lea.sflag [#allocation5], 1
    %748 = vsyncpa %s747, 1
    %749 = vsyncpa [#allocation13], 1
    %s750 = scalar_lea.sflag [#allocation13], 1
    %751 = vsyncpa %s750, 1

</llo_original>
